<compile_context>
chip_gen: v5e
topology: v5e:2x2
jax: 0.10.0
libtpu: 0.0.40
codegen_flags: <defaults>
</compile_context>

<pallas_src>
import functools

import jax
import jax.numpy as jnp
from jax.experimental import pallas as pl
from jax.experimental.pallas import tpu as pltpu


def _pannsloss_kernel(x_ref, t_ref, o_ref, acc_ref, *, tb, c, b, fold_rows):
    pid = pl.program_id(0)

    @pl.when(pid == 0)
    def _init():
        acc_ref[...] = jnp.zeros_like(acc_ref)

    x = x_ref[...].astype(jnp.float32)
    t = t_ref[...].astype(jnp.float32)

    # Single fused sanitize pass: NaN / +-Inf -> 0.
    bad = jnp.isnan(x) | jnp.isinf(x)
    x = jnp.where(bad, 0.0, x)

    # BCE with PyTorch's log clamp at -100, rewritten with one multiply:
    #   t*log(x) + (1-t)*log(1-x) = log(1-x) + t*(log(x) - log(1-x))
    log_x = jnp.maximum(jnp.log(x), -100.0)
    log_1mx = jnp.maximum(jnp.log(1.0 - x), -100.0)
    loss = -(log_1mx + t * (log_x - log_1mx))

    # Mask rows of the (possibly ragged) last tile that fall outside the batch.
    if b % tb != 0:
        row_ids = jax.lax.broadcasted_iota(jnp.int32, (tb, c), 0) + pid * tb
        loss = jnp.where(row_ids < b, loss, 0.0)

    # Fold the (tb, c) tile into the (fold_rows, c) accumulator with pure
    # elementwise (VPU) adds; the XLU reduce happens once, in the finalize.
    if fold_rows != tb:
        loss = loss.reshape(tb // fold_rows, fold_rows, c).sum(axis=0)
    acc_ref[...] += loss

    @pl.when(pid == pl.num_programs(0) - 1)
    def _finalize():
        # Single cross-lane/sublane reduce + constant multiply (no per-tile div).
        o_ref[0, 0] = jnp.sum(acc_ref[...]) * jnp.float32(1.0 / (b * c))


def panns_loss(input_dict, target, *, tb=None):
    """JAX/Pallas equivalent of PANNsLoss.forward(input, target)."""
    x = input_dict["clipwise_output"]
    assert x.shape == target.shape
    b, c = x.shape

    # Row-tile size: full batch for small B, else 512-row tiles (multiple of 8).
    # 2 inputs x 2 buffers x (512, C) f32 stays well inside the scoped-VMEM
    # default on v5e/v6e/v7x, so no vmem_limit_bytes override is needed.
    if tb is None:
        tb = b if b <= 512 else 512
    tb = min(tb, b)
    grid = pl.cdiv(b, tb)
    fold_rows = 8 if (tb % 8 == 0) else tb

    kernel = functools.partial(
        _pannsloss_kernel, tb=tb, c=c, b=b, fold_rows=fold_rows
    )

    out = pl.pallas_call(
        kernel,
        out_shape=jax.ShapeDtypeStruct((1, 1), jnp.float32),
        grid=(grid,),
        in_specs=[
            pl.BlockSpec((tb, c), lambda i: (i, 0)),
            pl.BlockSpec((tb, c), lambda i: (i, 0)),
        ],
        # Scalar output lives in SMEM: no masked vst.msk partial stores and it
        # stays out of the VMEM pipelining machinery.
        out_specs=pl.BlockSpec(memory_space=pltpu.MemorySpace.SMEM),
        scratch_shapes=[pltpu.VMEM((fold_rows, c), jnp.float32)],
        compiler_params=pltpu.CompilerParams(
            dimension_semantics=("arbitrary",),  # carried accumulator -> arbitrary
        ),
    )(x, target)  # target kept in its native dtype; upcast happens in-kernel
    return out[0, 0]


if __name__ == "__main__":
    key = jax.random.PRNGKey(0)
    k1, k2 = jax.random.split(key)

    # Small shapes; B=20 with an 8-row tile exercises the grid AND the ragged
    # last-tile masking path (20 % 8 != 0).
    B, C = 20, 128

    # Probabilities in (0, 1) with NaN / +-Inf injected to exercise sanitization.
    probs = jax.random.uniform(k1, (B, C), dtype=jnp.float32, minval=0.01, maxval=0.99)
    probs = probs.at[0, 0].set(jnp.nan)
    probs = probs.at[1, 5].set(jnp.inf)
    probs = probs.at[2, 7].set(-jnp.inf)

    # Target stays in a narrow native dtype (bf16); the kernel upcasts in VMEM.
    target = jax.random.bernoulli(k2, 0.3, (B, C)).astype(jnp.bfloat16)

    loss = panns_loss({"clipwise_output": probs}, target, tb=8)
    jax.block_until_ready(loss)

    # Pure-JAX reference.
    t32 = target.astype(jnp.float32)
    x_ref = jnp.where(jnp.isnan(probs) | jnp.isinf(probs), 0.0, probs)
    ref = jnp.mean(
        -(t32 * jnp.maximum(jnp.log(x_ref), -100.0)
          + (1.0 - t32) * jnp.maximum(jnp.log(1.0 - x_ref), -100.0))
    )
    assert jnp.allclose(loss, ref, rtol=1e-5, atol=1e-5), (loss, ref)

    print("KERNEL_OK")
</pallas_src>

<mosaic_0001>
module attributes {stable_mosaic.version = 11 : i64} {
  func.func @_pannsloss_kernel(%arg0: i32, %arg1: memref<8x128xf32, #tpu.memory_space<vmem>>, %arg2: memref<8x128xbf16, #tpu.memory_space<vmem>>, %arg3: memref<1x1xf32, #tpu.memory_space<smem>>, %arg4: memref<8x128xf32, #tpu.memory_space<vmem>>) attributes {dimension_semantics = [#tpu.dimension_semantics<arbitrary>], iteration_bounds = array<i64: 3>, scalar_prefetch = 0 : i64, scratch_operands = 1 : i64, tpu.core_type = #tpu.core_type<tc>, window_params = [{transform_indices = @transform_0, window_bounds = array<i64: 8, 128>}, {transform_indices = @transform_1, window_bounds = array<i64: 8, 128>}, {transform_indices = @transform_2, window_bounds = array<i64: 1, 1>}]} {
    %c0_i32 = arith.constant 0 : i32
    %0 = arith.cmpi eq, %arg0, %c0_i32 : i32
    %1 = arith.extui %0 : i1 to i32
    %c0_i32_0 = arith.constant 0 : i32
    %2 = arith.cmpi ne, %1, %c0_i32_0 : i32
    scf.if %2 {
      %cst_15 = arith.constant 0.000000e+00 : f32
      %40 = vector.broadcast %cst_15 : f32 to vector<8x128xf32>
      %c0_16 = arith.constant 0 : index
      %c0_17 = arith.constant 0 : index
      %41 = vector.load %arg4[%c0_16, %c0_17] : memref<8x128xf32, #tpu.memory_space<vmem>>, vector<8x128xf32>
      tpu.vector_store %arg4[%c0_16, %c0_17], %40 {strides = array<i32>} : memref<8x128xf32, #tpu.memory_space<vmem>>, vector<8x128xf32>,
    } else {
    }
    %c0 = arith.constant 0 : index
    %c0_1 = arith.constant 0 : index
    %3 = vector.load %arg1[%c0, %c0_1] : memref<8x128xf32, #tpu.memory_space<vmem>>, vector<8x128xf32>
    %c0_2 = arith.constant 0 : index
    %c0_3 = arith.constant 0 : index
    %4 = vector.load %arg2[%c0_2, %c0_3] : memref<8x128xbf16, #tpu.memory_space<vmem>>, vector<8x128xbf16>
    %5 = arith.extf %4 : vector<8x128xbf16> to vector<8x128xf32>
    %6 = arith.cmpf one, %3, %3 : vector<8x128xf32>
    %7 = math.absf %3 : vector<8x128xf32>
    %cst = arith.constant 0x7F800000 : f32
    %8 = vector.broadcast %cst : f32 to vector<8x128xf32>
    %9 = arith.cmpf oeq, %7, %8 : vector<8x128xf32>
    %10 = arith.ori %6, %9 : vector<8x128xi1>
    %cst_4 = arith.constant 0.000000e+00 : f32
    %11 = vector.broadcast %cst_4 : f32 to vector<8x128xf32>
    %12 = arith.select %10, %11, %3 : vector<8x128xi1>, vector<8x128xf32>
    %13 = math.log %12 : vector<8x128xf32>
    %cst_5 = arith.constant -1.000000e+02 : f32
    %14 = vector.broadcast %cst_5 : f32 to vector<8x128xf32>
    %15 = arith.maximumf %13, %14 : vector<8x128xf32>
    %cst_6 = arith.constant 1.000000e+00 : f32
    %16 = vector.broadcast %cst_6 : f32 to vector<8x128xf32>
    %17 = arith.subf %16, %12 : vector<8x128xf32>
    %18 = math.log %17 : vector<8x128xf32>
    %cst_7 = arith.constant -1.000000e+02 : f32
    %19 = vector.broadcast %cst_7 : f32 to vector<8x128xf32>
    %20 = arith.maximumf %18, %19 : vector<8x128xf32>
    %21 = arith.subf %15, %20 : vector<8x128xf32>
    %22 = arith.mulf %5, %21 : vector<8x128xf32>
    %23 = arith.addf %20, %22 : vector<8x128xf32>
    %cst_8 = arith.constant 0.000000e+00 : f32
    %24 = vector.broadcast %cst_8 : f32 to vector<8x128xf32>
    %25 = arith.subf %24, %23 : vector<8x128xf32>
    %26 = tpu.iota {dimensions = array<i32: 0>} : vector<8x128xi32>
    %c8_i32 = arith.constant 8 : i32
    %27 = arith.muli %arg0, %c8_i32 : i32
    %28 = vector.broadcast %27 : i32 to vector<8x128xi32>
    %29 = arith.addi %26, %28 : vector<8x128xi32>
    %c20_i32 = arith.constant 20 : i32
    %30 = vector.broadcast %c20_i32 : i32 to vector<8x128xi32>
    %31 = arith.cmpi slt, %29, %30 : vector<8x128xi32>
    %cst_9 = arith.constant 0.000000e+00 : f32
    %32 = vector.broadcast %cst_9 : f32 to vector<8x128xf32>
    %33 = arith.select %31, %25, %32 : vector<8x128xi1>, vector<8x128xf32>
    %c0_10 = arith.constant 0 : index
    %c0_11 = arith.constant 0 : index
    %34 = vector.load %arg4[%c0_10, %c0_11] : memref<8x128xf32, #tpu.memory_space<vmem>>, vector<8x128xf32>
    %35 = arith.addf %34, %33 : vector<8x128xf32>
    %c0_12 = arith.constant 0 : index
    %c0_13 = arith.constant 0 : index
    %36 = vector.load %arg4[%c0_12, %c0_13] : memref<8x128xf32, #tpu.memory_space<vmem>>, vector<8x128xf32>
    tpu.vector_store %arg4[%c0_12, %c0_13], %35 {strides = array<i32>} : memref<8x128xf32, #tpu.memory_space<vmem>>, vector<8x128xf32>,
    %c2_i32 = arith.constant 2 : i32
    %37 = arith.cmpi eq, %arg0, %c2_i32 : i32
    %38 = arith.extui %37 : i1 to i32
    %c0_i32_14 = arith.constant 0 : i32
    %39 = arith.cmpi ne, %38, %c0_i32_14 : i32
    scf.if %39 {
      %c0_15 = arith.constant 0 : index
      %c0_16 = arith.constant 0 : index
      %40 = vector.load %arg4[%c0_15, %c0_16] : memref<8x128xf32, #tpu.memory_space<vmem>>, vector<8x128xf32>
      %41 = vector.shape_cast %40 : vector<8x128xf32> to vector<1x8x128xf32>
      %cst_17 = arith.constant dense<0.000000e+00> : vector<1xf32>
      %42 = vector.multi_reduction <add>, %41, %cst_17 [1, 2] : vector<1x8x128xf32> to vector<1xf32>
      %43 = vector.shape_cast %42 : vector<1xf32> to vector<1x1x1xf32>
      %44 = vector.extract %43[0, 0, 0] : f32 from vector<1x1x1xf32>
      %cst_18 = arith.constant 3.906250e-04 : f32
      %45 = arith.mulf %44, %cst_18 : f32
      %c0_19 = arith.constant 0 : index
      %c0_20 = arith.constant 0 : index
      %46 = memref.load %arg3[%c0_19, %c0_20] : memref<1x1xf32, #tpu.memory_space<smem>>
      memref.store %45, %arg3[%c0_19, %c0_20] : memref<1x1xf32, #tpu.memory_space<smem>>
    } else {
    }
    return
  }
  func.func @transform_0(%arg0: i32) -> (i32, i32) {
    %c0_i32 = arith.constant 0 : i32
    %c0_i32_0 = arith.constant 0 : i32
    return %arg0, %c0_i32 : i32, i32
  }
  func.func @transform_1(%arg0: i32) -> (i32, i32) {
    %c0_i32 = arith.constant 0 : i32
    %c0_i32_0 = arith.constant 0 : i32
    return %arg0, %c0_i32 : i32, i32
  }
  func.func @transform_2(%arg0: i32) -> (i32, i32) {
    %c0_i32 = arith.constant 0 : i32
    %c0_i32_0 = arith.constant 0 : i32
    %c0_i32_1 = arith.constant 0 : i32
    return %c0_i32, %c0_i32_0 : i32, i32
  }
}

</mosaic_0001>

<llo_original>
// kernel: tpu_custom_call.1
$region0: #{tpu_custom_call.1}
  #allocation0 [shape = 'u32[]', space=smem, size = 0x4, offset = 0x4, fixed_abs, tag = 'smem constant byte address 0x4 - core index']
  #allocation1 [shape = 'u32[72,128]{1,0:T(1,128)}', space=vmem, size = 0x9000, scoped, tag = 'internal scratch']
  #allocation2 [shape = 'f32[8,128]{1,0:T(8,128)}', space=vmem, size = 0x1000, scoped, tag = 'scratch operand']
  %s0 = inlined_call_operand.hbm [shape: f32[20,128], index: 0, kind: input, shape index: {}]
  %s1 = inlined_call_operand.hbm [shape: bf16[20,128], index: 1, kind: input, shape index: {}]
  %s2 = inlined_call_operand.hbm [shape: f32[1,1], index: 2, kind: output, shape index: {}]
  %s3 = sld [smem:[#allocation0]]
  $region57: #{tpu_custom_call.1} parent=0
    _
  %s5 = ssub.s32 1, %s3
  %s6 = scalar_select 0, %s5, %s3
  $region1: #{tpu_custom_call.1} parent=0
    #allocation3 [shape = 'u8[8192]{0}', space=vmem, size = 0x2000, scoped, tag = 'input window, operand 0']
    #allocation4 [shape = 's32[2]{0}', space=sflag, size = 0x8, scoped, tag = 'scoped memory for tpu_custom_call.1']
    #allocation5 [shape = 's32[2]{0}', space=sflag, size = 0x8, scoped, tag = 'scoped memory for tpu_custom_call.1']
    #allocation6 [shape = 'u8[4096]{0}', space=vmem, size = 0x1000, scoped, tag = 'input window, operand 1']
    #allocation7 [shape = 's32[2]{0}', space=sflag, size = 0x8, scoped, tag = 'scoped memory for tpu_custom_call.1']
    #allocation8 [shape = 'u8[512]{0}', space=smem, size = 0x200, scoped, tag = 'output window, operand 0, single buffered']
    %7 = vsyncpa [#allocation4], 0
    %s8 = scalar_lea.sflag [#allocation4], 1
    %9 = vsyncpa %s8, 0
    %10 = vsyncpa [#allocation7], 0
    %s11 = scalar_lea.sflag [#allocation7], 1
    %12 = vsyncpa %s11, 0
    %13 = vsyncpa [#allocation5], 0
    loop: start=0, step=1, limit=5
    $region2: #{tpu_custom_call.1} parent=1 // loop_pre_header
      _
    $region3: #{tpu_custom_call.1} parent=1 // loop_header
      %s15 = sphi 0, %s19
      %p16 = scmp.ge.s32.totalorder %s15, 5
      %s25 = sphi 0, %s27
      %s28 = sphi 0, %s25
      %s29 = sphi 0, %s28
      %s45 = sphi 0, %s29
      %s51 = sphi 0, %s53
      %s54 = sphi 0, %s51
      %s55 = sphi 0, %s54
      %s71 = sphi 0, %s55
      %s75 = sphi 0, %s75
      %s77 = sphi 0, %s75
      %s78 = sphi 0, %s77
      %s92 = sphi 0, %s78
    $region4: #{tpu_custom_call.1} parent=1 // loop_header_branch
      %18 = sbr.rel (%p16) target = $region8
    $region5: #{tpu_custom_call.1} parent=1 // loop_body
      %s20 = ssub.s32 %s15, 1
      %s21 = ssub.s32 %s15, 2
      %s22 = sadd.s32 %s15, 1
      %s23 = ssub.s32 %s15, %s22
      %p24 = scmp.eq.s32.totalorder %s23, 0
      %s26 = sadd.s32 %s25, 1
      %s27 = scalar_select %p24, %s25, %s26
      %p30 = pneg %p24
      %p31 = scmp.eq.s32.totalorder %s15, 2
      %p32 = por %p30, %p31
      %p33 = scmp.ne.s32.totalorder %s25, %s28
      %p34 = scmp.eq.s32.totalorder %s15, 0
      %p35 = por %p33, %p34
      %p36 = scmp.ne.s32.totalorder %s25, %s28
      %p37 = scmp.eq.s32.totalorder %s20, 2
      %p38 = por %p36, %p37
      %p39 = scmp.ne.s32.totalorder %s28, %s29
      %p40 = scmp.eq.s32.totalorder %s20, 0
      %p41 = por %p39, %p40
      %p42 = scmp.ne.s32.totalorder %s28, %s29
      %p43 = scmp.eq.s32.totalorder %s21, 2
      %p44 = por %p42, %p43
      %p46 = scmp.ne.s32.totalorder %s29, %s45
      %p47 = scmp.eq.s32.totalorder %s21, 0
      %p48 = por %p46, %p47
      %s49 = ssub.s32 %s15, %s22
      %p50 = scmp.eq.s32.totalorder %s49, 0
      %s52 = sadd.s32 %s51, 1
      %s53 = scalar_select %p50, %s51, %s52
      %p56 = pneg %p50
      %p57 = scmp.eq.s32.totalorder %s15, 2
      %p58 = por %p56, %p57
      %p59 = scmp.ne.s32.totalorder %s51, %s54
      %p60 = scmp.eq.s32.totalorder %s15, 0
      %p61 = por %p59, %p60
      %p62 = scmp.ne.s32.totalorder %s51, %s54
      %p63 = scmp.eq.s32.totalorder %s20, 2
      %p64 = por %p62, %p63
      %p65 = scmp.ne.s32.totalorder %s54, %s55
      %p66 = scmp.eq.s32.totalorder %s20, 0
      %p67 = por %p65, %p66
      %p68 = scmp.ne.s32.totalorder %s54, %s55
      %p69 = scmp.eq.s32.totalorder %s21, 2
      %p70 = por %p68, %p69
      %p72 = scmp.ne.s32.totalorder %s55, %s71
      %p73 = scmp.eq.s32.totalorder %s21, 0
      %p74 = por %p72, %p73
      %s76 = sadd.s32 %s75, 1
      %p79 = scmp.eq.s32.totalorder %s15, 2
      %p80 = scmp.ne.s32.totalorder %s75, %s77
      %p81 = scmp.eq.s32.totalorder %s15, 0
      %p82 = por %p80, %p81
      %p83 = scmp.ne.s32.totalorder %s75, %s77
      %p84 = scmp.eq.s32.totalorder %s20, 2
      %p85 = por %p83, %p84
      %p86 = scmp.ne.s32.totalorder %s77, %s78
      %p87 = scmp.eq.s32.totalorder %s20, 0
      %p88 = por %p86, %p87
      %p89 = scmp.ne.s32.totalorder %s77, %s78
      %p90 = scmp.eq.s32.totalorder %s21, 2
      %p91 = por %p89, %p90
      %p93 = scmp.ne.s32.totalorder %s78, %s92
      %p94 = scmp.eq.s32.totalorder %s21, 0
      %p95 = por %p93, %p94
      %p96 = scmp.le.s32.totalorder 1, %s15
      %p97 = scmp.lt.s32.totalorder %s15, 4
      %p98 = pnand %p96, %p97
      %p99 = pneg %p98
      // Predicated region
      $region9: #{tpu_custom_call.1} parent=5 // pred_check
        _
      $region10: #{tpu_custom_call.1} parent=5 // pred_check_branch
        %101 = sbr.rel (%p98) target = $region12
      $region11: #{tpu_custom_call.1} parent=5 // pred_region
        %s102 = ssub.s32 %s15, 1
      $region12: #{tpu_custom_call.1} parent=5 // pred_fallthru
        _
      %p103 = scmp.lt.s32.totalorder %s15, 3
      // Predicated region
      $region13: #{tpu_custom_call.1} parent=5 // pred_check
        %p104 = pneg %p103
      $region14: #{tpu_custom_call.1} parent=5 // pred_check_branch
        %106 = sbr.rel (%p104) target = $region16
      $region15: #{tpu_custom_call.1} parent=5 // pred_region
        // Predicated region
        $region17: #{tpu_custom_call.1} parent=15 // pred_check
          %p107 = pneg %p35
        $region18: #{tpu_custom_call.1} parent=15 // pred_check_branch
          %109 = sbr.rel (%p107) target = $region20
        $region19: #{tpu_custom_call.1} parent=15 // pred_region
          %s110 = sand.u32 %s25, 1
          %s111 = scalar_lea.sflag [#allocation4], %s110
          %s112 = sand.u32 %s25, 1
          %s113 = smul.addr %s112, 8
          %s114 = scalar_lea.vmem [#allocation3], %s113
          %116 = vsyncadd %s111, 0
          %s117 = smul.addr %s15, 8
          %s118 = scalar_lea.hbm %s0, %s117
          %s120 = sshll.u32 %s118, 4
          %s121 = int_to_ptr.hbm [resolvable:$true] %s120
          %s122 = sshll.u32 %s114, 4
          %s123 = int_to_ptr.vmem [resolvable:$true] %s122
          %125 = dma.hbm_to_vmem [thread:$0]  %s121, 128, %s123, %s111
        $region20: #{tpu_custom_call.1} parent=15 // pred_fallthru
          _
        // Predicated region
        $region21: #{tpu_custom_call.1} parent=15 // pred_check
          %p126 = pneg %p61
        $region22: #{tpu_custom_call.1} parent=15 // pred_check_branch
          %128 = sbr.rel (%p126) target = $region24
        $region23: #{tpu_custom_call.1} parent=15 // pred_region
          %s129 = sand.u32 %s51, 1
          %s130 = scalar_lea.sflag [#allocation7], %s129
          %s131 = sand.u32 %s51, 1
          %s132 = smul.addr %s131, 4
          %s133 = scalar_lea.vmem [#allocation6], %s132
          %135 = vsyncadd %s130, 0
          %s136 = smul.addr %s15, 4
          %s137 = scalar_lea.hbm %s1, %s136
          %s139 = sshll.u32 %s137, 4
          %s140 = int_to_ptr.hbm [resolvable:$true] %s139
          %s141 = sshll.u32 %s133, 4
          %s142 = int_to_ptr.vmem [resolvable:$true] %s141
          %144 = dma.hbm_to_vmem [thread:$0]  %s140, 64, %s142, %s130
        $region24: #{tpu_custom_call.1} parent=15 // pred_fallthru
          _
      $region16: #{tpu_custom_call.1} parent=5 // pred_fallthru
        _
      %p145 = scmp.le.s32.totalorder 1, %s15
      %p146 = scmp.lt.s32.totalorder %s15, 4
      %p147 = pnand %p145, %p146
      %p148 = pneg %p147
      // Predicated region
      $region25: #{tpu_custom_call.1} parent=5 // pred_check
        _
      $region26: #{tpu_custom_call.1} parent=5 // pred_check_branch
        %150 = sbr.rel (%p147) target = $region28
      $region27: #{tpu_custom_call.1} parent=5 // pred_region
        %s151 = ssub.s32 %s15, 1
        %s152 = sand.u32 %s28, 1
        %s153 = scalar_lea.sflag [#allocation4], %s152
        %s154 = sand.u32 %s28, 1
        %s155 = smul.addr %s154, 8
        %s156 = scalar_lea.vmem [#allocation3], %s155
        // Predicated region
        $region29: #{tpu_custom_call.1} parent=27 // pred_check
          %p157 = pneg %p41
        $region30: #{tpu_custom_call.1} parent=27 // pred_check_branch
          %159 = sbr.rel (%p157) target = $region32
        $region31: #{tpu_custom_call.1} parent=27 // pred_region
          %161 = dma.done %s153, 128
        $region32: #{tpu_custom_call.1} parent=27 // pred_fallthru
          _
        %s162 = sand.u32 %s54, 1
        %s163 = scalar_lea.sflag [#allocation7], %s162
        %s164 = sand.u32 %s54, 1
        %s165 = smul.addr %s164, 4
        %s166 = scalar_lea.vmem [#allocation6], %s165
        // Predicated region
        $region33: #{tpu_custom_call.1} parent=27 // pred_check
          %p167 = pneg %p67
        $region34: #{tpu_custom_call.1} parent=27 // pred_check_branch
          %169 = sbr.rel (%p167) target = $region36
        $region35: #{tpu_custom_call.1} parent=27 // pred_region
          %171 = dma.done %s163, 64
        $region36: #{tpu_custom_call.1} parent=27 // pred_fallthru
          _
        %s172 = sand.u32 %s28, 1
        %s173 = scalar_lea.sflag [#allocation4], %s172
        %s174 = sand.u32 %s28, 1
        %s175 = smul.addr %s174, 8
        %s176 = scalar_lea.vmem [#allocation3], %s175
        %p177 = pneg %p41
        %p178 = pneg %p38
        %s179 = sand.u32 %s54, 1
        %s180 = scalar_lea.sflag [#allocation7], %s179
        %s181 = sand.u32 %s54, 1
        %s182 = smul.addr %s181, 4
        %s183 = scalar_lea.vmem [#allocation6], %s182
        %p184 = pneg %p67
        %p185 = pneg %p64
        %p186 = pneg %p88
        %p187 = pneg %p85
        %p188 = scmp.eq.s32.totalorder %s20, 0
        // Predicated region
        $region37: #{tpu_custom_call.1} parent=27 // pred_check
          %p189 = pneg %p188
        $region38: #{tpu_custom_call.1} parent=27 // pred_check_branch
          %191 = sbr.rel (%p189) target = $region40
        $region39: #{tpu_custom_call.1} parent=27 // pred_region
          %192 = vst [vmem:[#allocation2] sm:$0xff] 0.0
        $region40: #{tpu_custom_call.1} parent=27 // pred_fallthru
          _
        %v193 = vld [vmem:[%s156] sm:$0xff]
        %v194 = vld [vmem:[%s166] sm:$0xf]
        %v195 = vunpack.c.l.bf16 %v194
        %vm196 = vcmp.ne.f32.partialorder %v193, %v193
        %v197 = vand.u32 2147483647, %v193
        %vm198 = vcmp.eq.f32.partialorder %v197, inf
        %vm199 = vmor %vm196, %vm198
        %v200 = vsel %vm199, 0.0, %v193
        %v201 = vlog2.pop %v200
        %v202 = vmul.f32 %v201, 0.6931472
        %v203 = vmax.f32 %v202, -100.0
        %v204 = vsub.f32 1.0, %v200
        %v205 = vlog2.pop %v204
        %v206 = vmul.f32 %v205, 0.6931472
        %v207 = vmax.f32 %v206, -100.0
        %v208 = vsub.f32 %v203, %v207
        %v209 = vmul.f32 %v195, %v208
        %v210 = vadd.f32 %v207, %v209
        %v211 = vsub.f32 0.0, %v210
        %v212 = vlaneseq
        %v213 = vshrl.u32 %v212, 7
        %s214 = smul.u32 %s20, 8
        %v215 = vstv %s214
        %v216 = vadd.s32 %v213, %v215
        %vm217 = vcmp.lt.s32.totalorder %v216, 20
        %v218 = vsel %vm217, %v211, 0.0
        %v219 = vld [vmem:[#allocation2] sm:$0xff]
        %v220 = vadd.f32 %v219, %v218
        %221 = vst [vmem:[#allocation2] sm:$0xff] %v220
        %p222 = scmp.eq.s32.totalorder %s20, 2
        // Predicated region
        $region41: #{tpu_custom_call.1} parent=27 // pred_check
          %p223 = pneg %p222
        $region42: #{tpu_custom_call.1} parent=27 // pred_check_branch
          %225 = sbr.rel (%p223) target = $region44
        $region43: #{tpu_custom_call.1} parent=27 // pred_region
          %v226 = vld [vmem:[#allocation2] sm:$0xff]
          %227 = vadd.xlane.f32.xlu0 %v226
          %v228 = vpop.xlane.xlu0 %227
          %v229 = vrot.slane %v228, 4
          %v230 = vadd.f32 %v228, %v229
          %v231 = vrot.slane %v230, 2
          %v232 = vadd.f32 %v230, %v231
          %v233 = vrot.slane %v232, 1
          %v234 = vadd.f32 %v232, %v233
          %s235 = vtos %v234
          %s236 = smul.f32 %s235, 0.000390625
          %s237 = scalar_lea.smem [#allocation8], 0
          %238 = sst [smem:[%s237]] %s236
        $region44: #{tpu_custom_call.1} parent=27 // pred_fallthru
          _
        // Predicated region
        $region45: #{tpu_custom_call.1} parent=27 // pred_check
          %p239 = pneg %p85
        $region46: #{tpu_custom_call.1} parent=27 // pred_check_branch
          %241 = sbr.rel (%p239) target = $region48
        $region47: #{tpu_custom_call.1} parent=27 // pred_region
          %243 = vsyncadd [#allocation5], 0
          %s245 = sshll.u32 %s2, 4
          %s246 = int_to_ptr.hbm [resolvable:$true] %s245
          %248 = dma.smem_to_hbm [#allocation8], 16, %s246, [#allocation5]
        $region48: #{tpu_custom_call.1} parent=27 // pred_fallthru
          _
        // Predicated region
        $region49: #{tpu_custom_call.1} parent=27 // pred_check
          %p249 = pneg %p85
        $region50: #{tpu_custom_call.1} parent=27 // pred_check_branch
          %251 = sbr.rel (%p249) target = $region52
        $region51: #{tpu_custom_call.1} parent=27 // pred_region
          %253 = dma.done [#allocation5], 16
        $region52: #{tpu_custom_call.1} parent=27 // pred_fallthru
          _
        %254 = sfence
      $region28: #{tpu_custom_call.1} parent=5 // pred_fallthru
        _
      %p255 = scmp.le.s32.totalorder 2, %s15
      // Predicated region
      $region53: #{tpu_custom_call.1} parent=5 // pred_check
        %p256 = pneg %p255
      $region54: #{tpu_custom_call.1} parent=5 // pred_check_branch
        %258 = sbr.rel (%p256) target = $region56
      $region55: #{tpu_custom_call.1} parent=5 // pred_region
        %s259 = ssub.s32 %s15, 2
      $region56: #{tpu_custom_call.1} parent=5 // pred_fallthru
        _
    $region6: #{tpu_custom_call.1} parent=1 // loop_footer
      %s19 = sadd.s32 1, %s15
    $region7: #{tpu_custom_call.1} parent=1 // loop_footer_branch
      %14 = sbr.rel target = $region3
    $region8: #{tpu_custom_call.1} parent=1 // loop_exit
      _
    %260 = vsyncpa [#allocation4], 1
    %s261 = scalar_lea.sflag [#allocation4], 1
    %262 = vsyncpa %s261, 1
    %263 = vsyncpa [#allocation7], 1
    %s264 = scalar_lea.sflag [#allocation7], 1
    %265 = vsyncpa %s264, 1
    %266 = vsyncpa [#allocation5], 1
    %s267 = scalar_lea.sflag [#allocation5], 1
    %268 = vsyncpa %s267, 1

</llo_original>
